<compile_context>
chip_gen: v7x
topology: tpu7x:2x2x1
jax: 0.10.0
libtpu: 0.0.40
codegen_flags: <defaults>
</compile_context>

<pallas_src>
import functools

import jax
import jax.numpy as jnp
import numpy as np
from jax.experimental import pallas as pl
from jax.experimental.pallas import tpu as pltpu

K_PAD = 8  # zero-pad layer-0 fan-in (6) to the 8-sublane boundary


# ----------------------------------------------------------------------------
# Fused Pallas kernel: both 5-layer dense blocks in one pass
# ----------------------------------------------------------------------------
def _fused_pendulum_kernel(x_ref, w0_ref, wh_ref, wo_ref, bh_ref, bo_ref, o_ref):
    x = x_ref[...]          # (B, K_PAD)
    bh = bh_ref[...]        # (4, 2H) : biases of layers 0..3, q|p concatenated

    # Layer 0: [W0_q | W0_p] along N.
    h = jnp.dot(x, w0_ref[...], preferred_element_type=jnp.float32) + bh[0:1, :]
    h = jax.nn.sigmoid(h)

    # Hidden layers 1..3: block-diagonal (2H, 2H) weights keep q/p independent.
    for i in range(3):      # static unroll
        h = jnp.dot(h, wh_ref[i], preferred_element_type=jnp.float32) + bh[i + 1:i + 2, :]
        h = jax.nn.sigmoid(h)

    # Output layer (activate_last=False): block-diagonal -> [hq | hp].
    o_ref[...] = (jnp.dot(h, wo_ref[...], preferred_element_type=jnp.float32)
                  + bo_ref[...]).astype(o_ref.dtype)


# ----------------------------------------------------------------------------
# Parameter packing: per-network (W, b) lists -> 5 fused arrays
# ----------------------------------------------------------------------------
def pack_pendulum_params(params_q, params_p):
    assert len(params_q) == 5 and len(params_p) == 5
    in_q, h = params_q[0][0].shape
    in_p = params_p[0][0].shape[0]
    assert in_q == in_p, "fused kernel assumes q_input_dim == p_input_dim"
    assert in_q <= K_PAD
    out_dim = params_q[4][0].shape[1]

    # Layer 0: concat along output (lane) axis, zero-pad K -> K_PAD.
    w0 = jnp.zeros((K_PAD, 2 * h), jnp.float32)
    w0 = w0.at[:in_q, :h].set(params_q[0][0])
    w0 = w0.at[:in_p, h:].set(params_p[0][0])

    # Hidden layers 1..3: block-diagonal (2H, 2H), stacked into (3, 2H, 2H).
    wh = jnp.zeros((3, 2 * h, 2 * h), jnp.float32)
    for i in range(3):
        wh = wh.at[i, :h, :h].set(params_q[i + 1][0])
        wh = wh.at[i, h:, h:].set(params_p[i + 1][0])

    # Output layer: block-diagonal (2H, 2*out_dim).
    wo = jnp.zeros((2 * h, 2 * out_dim), jnp.float32)
    wo = wo.at[:h, :out_dim].set(params_q[4][0])
    wo = wo.at[h:, out_dim:].set(params_p[4][0])

    # Biases of layers 0..3 stacked into (4, 2H); output bias (1, 2*out_dim).
    bh = jnp.concatenate(
        [jnp.concatenate([params_q[i][1], params_p[i][1]], axis=-1) for i in range(4)],
        axis=0)
    bo = jnp.concatenate([params_q[4][1], params_p[4][1]], axis=-1)

    packed = dict(w0=w0, wh=wh, wo=wo, bh=bh, bo=bo)
    return packed, out_dim


# ----------------------------------------------------------------------------
# PendulumModel forward
# ----------------------------------------------------------------------------
@functools.partial(jax.jit, static_argnames=("out_dim",))
def pendulum_forward(dq1, dq2, dp1, dp2, m, t, dt, length, packed, *, out_dim):
    del t, dt  # accepted (as in the torch module) but unused
    x = jnp.concatenate([dq1, dq2, dp1, dp2, m, length], axis=-1)  # (B, 6)
    batch, feat = x.shape
    x = jnp.pad(x, ((0, 0), (0, K_PAD - feat)))                    # (B, 8)

    vmem = pl.BlockSpec(memory_space=pltpu.MemorySpace.VMEM)
    out = pl.pallas_call(
        _fused_pendulum_kernel,
        out_shape=jax.ShapeDtypeStruct((batch, 2 * out_dim), jnp.float32),
        in_specs=[vmem] * 6,
        out_specs=vmem,
    )(x, packed["w0"], packed["wh"], packed["wo"], packed["bh"], packed["bo"])

    return out[:, :out_dim], out[:, out_dim:]


# ----------------------------------------------------------------------------
# Parameter construction (deterministic, PyTorch-style uniform(-1/sqrt(fan_in)))
# ----------------------------------------------------------------------------
def init_ndense5_params(key, in_dim, h_dim, out_dim):
    dims = [in_dim, h_dim, h_dim, h_dim, h_dim, out_dim]
    params = []
    for i in range(5):
        fan_in, fan_out = dims[i], dims[i + 1]
        key, kw, kb = jax.random.split(key, 3)
        bound = 1.0 / jnp.sqrt(jnp.float32(fan_in))
        w = jax.random.uniform(kw, (fan_in, fan_out), jnp.float32, -bound, bound)
        b = jax.random.uniform(kb, (1, fan_out), jnp.float32, -bound, bound)
        params.append((w, b))
    return params


# Pure-JAX reference (one NDenseBlock) for numerical validation.
def _ref_ndense5(x, params):
    h = x
    for i, (w, b) in enumerate(params):
        h = h @ w + b
        if i < 4:
            h = jax.nn.sigmoid(h)
    return h


if __name__ == "__main__":
    batch = 8
    h_dim = 32
    q_input_dim = 6
    p_input_dim = 6
    output_dim = 1

    key = jax.random.PRNGKey(0)
    key, kq, kp, kx = jax.random.split(key, 4)

    params_q = init_ndense5_params(kq, q_input_dim, h_dim, output_dim)
    params_p = init_ndense5_params(kp, p_input_dim, h_dim, output_dim)
    packed, out_dim = pack_pendulum_params(params_q, params_p)

    ks = jax.random.split(kx, 6)
    dq1 = jax.random.normal(ks[0], (batch, 1), jnp.float32)
    dq2 = jax.random.normal(ks[1], (batch, 1), jnp.float32)
    dp1 = jax.random.normal(ks[2], (batch, 1), jnp.float32)
    dp2 = jax.random.normal(ks[3], (batch, 1), jnp.float32)
    m = jnp.abs(jax.random.normal(ks[4], (batch, 1), jnp.float32)) + 0.5
    length = jnp.abs(jax.random.normal(ks[5], (batch, 1), jnp.float32)) + 0.5
    t = jnp.zeros((batch, 1), jnp.float32)
    dt = jnp.full((batch, 1), 0.01, jnp.float32)

    hq, hp = pendulum_forward(dq1, dq2, dp1, dp2, m, t, dt, length,
                              packed, out_dim=out_dim)
    jax.block_until_ready((hq, hp))

    assert hq.shape == (batch, output_dim) and hp.shape == (batch, output_dim)
    assert hq.dtype == jnp.float32 and hp.dtype == jnp.float32

    # Validate fused block-diagonal kernel against the unfused reference.
    x_ref = jnp.concatenate([dq1, dq2, dp1, dp2, m, length], axis=-1)
    hq_ref = _ref_ndense5(x_ref, params_q)
    hp_ref = _ref_ndense5(x_ref, params_p)
    np.testing.assert_allclose(np.asarray(hq), np.asarray(hq_ref), rtol=1e-5, atol=1e-5)
    np.testing.assert_allclose(np.asarray(hp), np.asarray(hp_ref), rtol=1e-5, atol=1e-5)

    print("KERNEL_OK")
</pallas_src>

<mosaic_0001>
module attributes {stable_mosaic.version = 11 : i64} {
  func.func @_fused_pendulum_kernel(%arg0: memref<8x8xf32, #tpu.memory_space<vmem>>, %arg1: memref<8x64xf32, #tpu.memory_space<vmem>>, %arg2: memref<3x64x64xf32, #tpu.memory_space<vmem>>, %arg3: memref<64x2xf32, #tpu.memory_space<vmem>>, %arg4: memref<4x64xf32, #tpu.memory_space<vmem>>, %arg5: memref<1x2xf32, #tpu.memory_space<vmem>>, %arg6: memref<8x2xf32, #tpu.memory_space<vmem>>) attributes {dimension_semantics = [], scalar_prefetch = 0 : i64, scratch_operands = 0 : i64, tpu.core_type = #tpu.core_type<tc>} {
    %c0 = arith.constant 0 : index
    %c0_0 = arith.constant 0 : index
    %0 = vector.load %arg0[%c0, %c0_0] : memref<8x8xf32, #tpu.memory_space<vmem>>, vector<8x8xf32>
    %c0_1 = arith.constant 0 : index
    %c0_2 = arith.constant 0 : index
    %1 = vector.load %arg4[%c0_1, %c0_2] : memref<4x64xf32, #tpu.memory_space<vmem>>, vector<4x64xf32>
    %c0_3 = arith.constant 0 : index
    %c0_4 = arith.constant 0 : index
    %2 = vector.load %arg1[%c0_3, %c0_4] : memref<8x64xf32, #tpu.memory_space<vmem>>, vector<8x64xf32>
    %cst = arith.constant dense<0.000000e+00> : vector<8x64xf32>
    %3 = tpu.matmul %0, %2, %cst {dimension_numbers = #tpu.dot_dimension_numbers<[1], [0], [0], [1], [0, 0, 1, 1], [], []>} : vector<8x8xf32>, vector<8x64xf32>, vector<8x64xf32> -> vector<8x64xf32>
    %4 = vector.extract_strided_slice %1 {offsets = [0, 0], sizes = [1, 64], strides = [1, 1]} : vector<4x64xf32> to vector<1x64xf32>
    %5 = vector.broadcast %4 : vector<1x64xf32> to vector<8x64xf32>
    %6 = arith.addf %3, %5 : vector<8x64xf32>
    %7 = arith.negf %6 : vector<8x64xf32>
    %8 = math.exp %7 : vector<8x64xf32>
    %cst_5 = arith.constant 1.000000e+00 : f32
    %9 = vector.broadcast %cst_5 : f32 to vector<8x64xf32>
    %10 = arith.addf %9, %8 : vector<8x64xf32>
    %11 = arith.divf %9, %10 : vector<8x64xf32>
    %c0_6 = arith.constant 0 : index
    %c0_7 = arith.constant 0 : index
    %c0_8 = arith.constant 0 : index
    %12 = vector.load %arg2[%c0_6, %c0_7, %c0_8] : memref<3x64x64xf32, #tpu.memory_space<vmem>>, vector<1x64x64xf32>
    %13 = vector.shape_cast %12 : vector<1x64x64xf32> to vector<64x64xf32>
    %cst_9 = arith.constant dense<0.000000e+00> : vector<8x64xf32>
    %14 = tpu.matmul %11, %13, %cst_9 {dimension_numbers = #tpu.dot_dimension_numbers<[1], [0], [0], [1], [0, 0, 1, 1], [], []>} : vector<8x64xf32>, vector<64x64xf32>, vector<8x64xf32> -> vector<8x64xf32>
    %15 = vector.extract_strided_slice %1 {offsets = [1, 0], sizes = [1, 64], strides = [1, 1]} : vector<4x64xf32> to vector<1x64xf32>
    %16 = vector.broadcast %15 : vector<1x64xf32> to vector<8x64xf32>
    %17 = arith.addf %14, %16 : vector<8x64xf32>
    %18 = arith.negf %17 : vector<8x64xf32>
    %19 = math.exp %18 : vector<8x64xf32>
    %cst_10 = arith.constant 1.000000e+00 : f32
    %20 = vector.broadcast %cst_10 : f32 to vector<8x64xf32>
    %21 = arith.addf %20, %19 : vector<8x64xf32>
    %22 = arith.divf %20, %21 : vector<8x64xf32>
    %c1 = arith.constant 1 : index
    %c0_11 = arith.constant 0 : index
    %c0_12 = arith.constant 0 : index
    %23 = vector.load %arg2[%c1, %c0_11, %c0_12] : memref<3x64x64xf32, #tpu.memory_space<vmem>>, vector<1x64x64xf32>
    %24 = vector.shape_cast %23 : vector<1x64x64xf32> to vector<64x64xf32>
    %cst_13 = arith.constant dense<0.000000e+00> : vector<8x64xf32>
    %25 = tpu.matmul %22, %24, %cst_13 {dimension_numbers = #tpu.dot_dimension_numbers<[1], [0], [0], [1], [0, 0, 1, 1], [], []>} : vector<8x64xf32>, vector<64x64xf32>, vector<8x64xf32> -> vector<8x64xf32>
    %26 = vector.extract_strided_slice %1 {offsets = [2, 0], sizes = [1, 64], strides = [1, 1]} : vector<4x64xf32> to vector<1x64xf32>
    %27 = vector.broadcast %26 : vector<1x64xf32> to vector<8x64xf32>
    %28 = arith.addf %25, %27 : vector<8x64xf32>
    %29 = arith.negf %28 : vector<8x64xf32>
    %30 = math.exp %29 : vector<8x64xf32>
    %cst_14 = arith.constant 1.000000e+00 : f32
    %31 = vector.broadcast %cst_14 : f32 to vector<8x64xf32>
    %32 = arith.addf %31, %30 : vector<8x64xf32>
    %33 = arith.divf %31, %32 : vector<8x64xf32>
    %c2 = arith.constant 2 : index
    %c0_15 = arith.constant 0 : index
    %c0_16 = arith.constant 0 : index
    %34 = vector.load %arg2[%c2, %c0_15, %c0_16] : memref<3x64x64xf32, #tpu.memory_space<vmem>>, vector<1x64x64xf32>
    %35 = vector.shape_cast %34 : vector<1x64x64xf32> to vector<64x64xf32>
    %cst_17 = arith.constant dense<0.000000e+00> : vector<8x64xf32>
    %36 = tpu.matmul %33, %35, %cst_17 {dimension_numbers = #tpu.dot_dimension_numbers<[1], [0], [0], [1], [0, 0, 1, 1], [], []>} : vector<8x64xf32>, vector<64x64xf32>, vector<8x64xf32> -> vector<8x64xf32>
    %37 = vector.extract_strided_slice %1 {offsets = [3, 0], sizes = [1, 64], strides = [1, 1]} : vector<4x64xf32> to vector<1x64xf32>
    %38 = vector.broadcast %37 : vector<1x64xf32> to vector<8x64xf32>
    %39 = arith.addf %36, %38 : vector<8x64xf32>
    %40 = arith.negf %39 : vector<8x64xf32>
    %41 = math.exp %40 : vector<8x64xf32>
    %cst_18 = arith.constant 1.000000e+00 : f32
    %42 = vector.broadcast %cst_18 : f32 to vector<8x64xf32>
    %43 = arith.addf %42, %41 : vector<8x64xf32>
    %44 = arith.divf %42, %43 : vector<8x64xf32>
    %c0_19 = arith.constant 0 : index
    %c0_20 = arith.constant 0 : index
    %45 = vector.load %arg3[%c0_19, %c0_20] : memref<64x2xf32, #tpu.memory_space<vmem>>, vector<64x2xf32>
    %cst_21 = arith.constant dense<0.000000e+00> : vector<8x2xf32>
    %46 = tpu.matmul %44, %45, %cst_21 {dimension_numbers = #tpu.dot_dimension_numbers<[1], [0], [0], [1], [0, 0, 1, 1], [], []>} : vector<8x64xf32>, vector<64x2xf32>, vector<8x2xf32> -> vector<8x2xf32>
    %c0_22 = arith.constant 0 : index
    %c0_23 = arith.constant 0 : index
    %47 = vector.load %arg5[%c0_22, %c0_23] : memref<1x2xf32, #tpu.memory_space<vmem>>, vector<1x2xf32>
    %48 = vector.broadcast %47 : vector<1x2xf32> to vector<8x2xf32>
    %49 = arith.addf %46, %48 : vector<8x2xf32>
    %c0_24 = arith.constant 0 : index
    %c0_25 = arith.constant 0 : index
    %50 = vector.load %arg6[%c0_24, %c0_25] : memref<8x2xf32, #tpu.memory_space<vmem>>, vector<8x2xf32>
    tpu.vector_store %arg6[%c0_24, %c0_25], %49 {strides = array<i32>} : memref<8x2xf32, #tpu.memory_space<vmem>>, vector<8x2xf32>,
    return
  }
}

</mosaic_0001>

<llo_original>
// kernel: pendulum_forward.1
$region0: #{pendulum_forward.1}
  #allocation0 [shape = 'u32[]', space=smem, size = 0x4, offset = 0x4, fixed_abs, tag = 'smem constant byte address 0x4 - core index']
  #allocation1 [shape = 'u32[144,128]{1,0:T(1,128)}', space=vmem, size = 0x12000, scoped, tag = 'internal scratch']
  %s0 = inlined_call_operand.vmem [shape: f32[8,8], index: 0, kind: input, shape index: {}]
  %s1 = inlined_call_operand.vmem [shape: f32[8,64], index: 1, kind: input, shape index: {}]
  %s2 = inlined_call_operand.vmem [shape: f32[3,64,64], index: 2, kind: input, shape index: {}]
  %s3 = inlined_call_operand.vmem [shape: f32[64,2], index: 3, kind: input, shape index: {}]
  %s4 = inlined_call_operand.vmem [shape: f32[4,64], index: 4, kind: input, shape index: {}]
  %s5 = inlined_call_operand.vmem [shape: f32[1,2], index: 5, kind: input, shape index: {}]
  %s6 = inlined_call_operand.vmem [shape: f32[8,2], index: 6, kind: output, shape index: {}]
  %s7 = sld [smem:[#allocation0]]
  $region34: #{pendulum_forward.1} parent=0
    _
  %s9 = ssub.s32 1, %s7
  %s10 = scalar_select 0, %s9, %s7
  // Predicated region
  $region2: #{pendulum_forward.1} parent=0 // pred_check
    _
  $region3: #{pendulum_forward.1} parent=0 // pred_check_branch
    %12 = sbr.rel (0) target = $region5
  $region4: #{pendulum_forward.1} parent=0 // pred_region
    _
  $region5: #{pendulum_forward.1} parent=0 // pred_fallthru
    _
  // Predicated region
  $region6: #{pendulum_forward.1} parent=0 // pred_check
    _
  $region7: #{pendulum_forward.1} parent=0 // pred_check_branch
    %14 = sbr.rel (0) target = $region9
  $region8: #{pendulum_forward.1} parent=0 // pred_region
    _
  $region9: #{pendulum_forward.1} parent=0 // pred_fallthru
    _
  // Predicated region
  $region10: #{pendulum_forward.1} parent=0 // pred_check
    _
  $region11: #{pendulum_forward.1} parent=0 // pred_check_branch
    %16 = sbr.rel (0) target = $region13
  $region12: #{pendulum_forward.1} parent=0 // pred_region
    _
  $region13: #{pendulum_forward.1} parent=0 // pred_fallthru
    _
  // Predicated region
  $region14: #{pendulum_forward.1} parent=0 // pred_check
    _
  $region15: #{pendulum_forward.1} parent=0 // pred_check_branch
    %18 = sbr.rel (0) target = $region17
  $region16: #{pendulum_forward.1} parent=0 // pred_region
    _
  $region17: #{pendulum_forward.1} parent=0 // pred_fallthru
    _
  // Predicated region
  $region18: #{pendulum_forward.1} parent=0 // pred_check
    _
  $region19: #{pendulum_forward.1} parent=0 // pred_check_branch
    %20 = sbr.rel (0) target = $region21
  $region20: #{pendulum_forward.1} parent=0 // pred_region
    _
  $region21: #{pendulum_forward.1} parent=0 // pred_fallthru
    _
  // Predicated region
  $region22: #{pendulum_forward.1} parent=0 // pred_check
    _
  $region23: #{pendulum_forward.1} parent=0 // pred_check_branch
    %22 = sbr.rel (0) target = $region25
  $region24: #{pendulum_forward.1} parent=0 // pred_region
    _
  $region25: #{pendulum_forward.1} parent=0 // pred_fallthru
    _
  %v23 = vld [vmem:[%s0] sm:$0xff]
  %v24 = vld [vmem:[%s4] sm:$0xf]
  %v25 = vld [vmem:[%s1] sm:$0xff]
  %v26 = vlaneseq
  %v27 = vshrl.u32 %v26, 7
  %v28 = vsub.s32 0, %v27
  %v29 = vrot.slane %v24, %v28
  %vm30 = vcmask 64512
  %v32 = vsel %vm30, %v23, 0
  %34 = vmatprep.subr.mxu0 0.0
  %35 = vmatpush1.msra.mxu0 %v25
  %36 = vmatprep.subr.mxu0 0.0
  %37 = vmatpush1.msra.mxu0 0.0
  %38 = vmatprep.subr.mxu0 0.0
  %39 = vmatpush1.msra.mxu0 0.0
  %40 = vmatprep.subr.mxu0 0.0
  %41 = vmatpush1.msra.mxu0 0.0
  %42 = vmatprep.subr.mxu0 0.0
  %43 = vmatpush1.msra.mxu0 0.0
  %44 = vmatprep.subr.mxu0 0.0
  %45 = vmatpush1.msra.mxu0 0.0
  %46 = vmatprep.subr.mxu0 0.0
  %47 = vmatpush1.msra.mxu0 0.0
  %48 = vmatprep.subr.mxu0 0.0
  %49 = vmatpush1.msra.mxu0 0.0
  %50 = vmatprep.subr.mxu0 0.0
  %51 = vmatpush1.msra.mxu0 0.0
  %52 = vmatprep.subr.mxu0 0.0
  %53 = vmatpush1.msra.mxu0 0.0
  %54 = vmatprep.subr.mxu0 0.0
  %55 = vmatpush1.msra.mxu0 0.0
  %56 = vmatprep.subr.mxu0 0.0
  %57 = vmatpush1.msra.mxu0 0.0
  %58 = vmatprep.subr.mxu0 0.0
  %59 = vmatpush1.msra.mxu0 0.0
  %60 = vmatprep.subr.mxu0 0.0
  %61 = vmatpush1.msra.mxu0 0.0
  %62 = vmatprep.subr.mxu0 0.0
  %63 = vmatpush1.msra.mxu0 0.0
  %64 = vmatprep.subr.mxu0 0.0
  %65 = vmatpush1.msra.mxu0 0.0
  %66 = vmatprep.subr.mxu0 0.0
  %67 = vmatpush1.msra.mxu0 0.0
  %68 = vmatprep.subr.mxu0 0.0
  %69 = vmatpush1.msra.mxu0 0.0
  %70 = vmatprep.subr.mxu0 0.0
  %71 = vmatpush1.msra.mxu0 0.0
  %72 = vmatprep.subr.mxu0 0.0
  %73 = vmatpush1.msra.mxu0 0.0
  %74 = vmatprep.subr.mxu0 0.0
  %75 = vmatpush1.msra.mxu0 0.0
  %76 = vmatprep.subr.mxu0 0.0
  %77 = vmatpush1.msra.mxu0 0.0
  %78 = vmatprep.subr.mxu0 0.0
  %79 = vmatpush1.msra.mxu0 0.0
  %80 = vmatprep.subr.mxu0 0.0
  %81 = vmatpush1.msra.mxu0 0.0
  %82 = vmatprep.subr.mxu0 0.0
  %83 = vmatpush1.msra.mxu0 0.0
  %84 = vmatprep.subr.mxu0 0.0
  %85 = vmatpush1.msra.mxu0 0.0
  %86 = vmatprep.subr.mxu0 0.0
  %87 = vmatpush1.msra.mxu0 0.0
  %88 = vmatprep.subr.mxu0 0.0
  %89 = vmatpush1.msra.mxu0 0.0
  %90 = vmatprep.subr.mxu0 0.0
  %91 = vmatpush1.msra.mxu0 0.0
  %92 = vmatprep.subr.mxu0 0.0
  %93 = vmatpush1.msra.mxu0 0.0
  %94 = vmatprep.subr.mxu0 0.0
  %95 = vmatpush1.msra.mxu0 0.0
  %96 = vmatprep.subr.mxu0 0.0
  %97 = vmatpush1.msra.mxu0 0.0
  %98 = vmatprep.mubr.f32.mxu0 0.0
  %99 = vmatmul.mubr.f32.gmra.mrb[0].mxu0 %v32
  %v100 = vpop.f32.mrb[0].mxu0
  %v101 = vadd.f32 %v29, %v100
  %v102 = vpop.f32.mrb[0].mxu0
  %103 = vdwg.mxu0
  %v104 = vxor.u32 %v101, 2147483648
  %v105 = vmul.f32 %v104, 1.442695
  %v106 = vpow.pop %v105
  %v107 = vadd.f32 %v106, 1.0
  %v108 = vrcp.pop %v107
  %v109 = vmul.f32 1.0, %v108
  %v110 = vld [vmem:[%s2] sm:$0xff]
  %v111 = vld [vmem:[%s2 + $0x8] sm:$0xff]
  %v112 = vld [vmem:[%s2 + $0x10] sm:$0xff]
  %v113 = vld [vmem:[%s2 + $0x18] sm:$0xff]
  %v114 = vld [vmem:[%s2 + $0x20] sm:$0xff]
  %v115 = vld [vmem:[%s2 + $0x28] sm:$0xff]
  %v116 = vld [vmem:[%s2 + $0x30] sm:$0xff]
  %v117 = vld [vmem:[%s2 + $0x38] sm:$0xff]
  %v118 = vlaneseq
  %v119 = vshrl.u32 %v118, 7
  %v120 = vsub.s32 1, %v119
  %v121 = vrot.slane %v24, %v120
  %vm122 = vcmask 523264
  %v124 = vsel %vm122, %v109, 0
  %126 = vmatprep.subr.mxu0 0.0
  %127 = vmatpush1.msra.mxu0 %v110
  %128 = vmatprep.subr.mxu0 0.0
  %129 = vmatpush1.msra.mxu0 %v111
  %130 = vmatprep.subr.mxu0 0.0
  %131 = vmatpush1.msra.mxu0 %v112
  %132 = vmatprep.subr.mxu0 0.0
  %133 = vmatpush1.msra.mxu0 %v113
  %134 = vmatprep.subr.mxu0 0.0
  %135 = vmatpush1.msra.mxu0 %v114
  %136 = vmatprep.subr.mxu0 0.0
  %137 = vmatpush1.msra.mxu0 %v115
  %138 = vmatprep.subr.mxu0 0.0
  %139 = vmatpush1.msra.mxu0 %v116
  %140 = vmatprep.subr.mxu0 0.0
  %141 = vmatpush1.msra.mxu0 %v117
  %142 = vmatprep.subr.mxu0 0.0
  %143 = vmatpush1.msra.mxu0 0.0
  %144 = vmatprep.subr.mxu0 0.0
  %145 = vmatpush1.msra.mxu0 0.0
  %146 = vmatprep.subr.mxu0 0.0
  %147 = vmatpush1.msra.mxu0 0.0
  %148 = vmatprep.subr.mxu0 0.0
  %149 = vmatpush1.msra.mxu0 0.0
  %150 = vmatprep.subr.mxu0 0.0
  %151 = vmatpush1.msra.mxu0 0.0
  %152 = vmatprep.subr.mxu0 0.0
  %153 = vmatpush1.msra.mxu0 0.0
  %154 = vmatprep.subr.mxu0 0.0
  %155 = vmatpush1.msra.mxu0 0.0
  %156 = vmatprep.subr.mxu0 0.0
  %157 = vmatpush1.msra.mxu0 0.0
  %158 = vmatprep.subr.mxu0 0.0
  %159 = vmatpush1.msra.mxu0 0.0
  %160 = vmatprep.subr.mxu0 0.0
  %161 = vmatpush1.msra.mxu0 0.0
  %162 = vmatprep.subr.mxu0 0.0
  %163 = vmatpush1.msra.mxu0 0.0
  %164 = vmatprep.subr.mxu0 0.0
  %165 = vmatpush1.msra.mxu0 0.0
  %166 = vmatprep.subr.mxu0 0.0
  %167 = vmatpush1.msra.mxu0 0.0
  %168 = vmatprep.subr.mxu0 0.0
  %169 = vmatpush1.msra.mxu0 0.0
  %170 = vmatprep.subr.mxu0 0.0
  %171 = vmatpush1.msra.mxu0 0.0
  %172 = vmatprep.subr.mxu0 0.0
  %173 = vmatpush1.msra.mxu0 0.0
  %174 = vmatprep.subr.mxu0 0.0
  %175 = vmatpush1.msra.mxu0 0.0
  %176 = vmatprep.subr.mxu0 0.0
  %177 = vmatpush1.msra.mxu0 0.0
  %178 = vmatprep.subr.mxu0 0.0
  %179 = vmatpush1.msra.mxu0 0.0
  %180 = vmatprep.subr.mxu0 0.0
  %181 = vmatpush1.msra.mxu0 0.0
  %182 = vmatprep.subr.mxu0 0.0
  %183 = vmatpush1.msra.mxu0 0.0
  %184 = vmatprep.subr.mxu0 0.0
  %185 = vmatpush1.msra.mxu0 0.0
  %186 = vmatprep.subr.mxu0 0.0
  %187 = vmatpush1.msra.mxu0 0.0
  %188 = vmatprep.subr.mxu0 0.0
  %189 = vmatpush1.msra.mxu0 0.0
  %190 = vmatprep.mubr.f32.mxu0 0.0
  %191 = vmatmul.mubr.f32.gmra.mrb[0].mxu0 %v124
  %v192 = vpop.f32.mrb[0].mxu0
  %v193 = vadd.f32 %v121, %v192
  %v194 = vpop.f32.mrb[0].mxu0
  %195 = vdwg.mxu0
  %v196 = vxor.u32 %v193, 2147483648
  %v197 = vmul.f32 %v196, 1.442695
  %v198 = vpow.pop %v197
  %v199 = vadd.f32 %v198, 1.0
  %v200 = vrcp.pop %v199
  %v201 = vmul.f32 1.0, %v200
  %s202 = scalar_lea.vmem %s2, 64
  %v203 = vld [vmem:[%s202] sm:$0xff]
  %v204 = vld [vmem:[%s202 + $0x8] sm:$0xff]
  %v205 = vld [vmem:[%s202 + $0x10] sm:$0xff]
  %v206 = vld [vmem:[%s202 + $0x18] sm:$0xff]
  %v207 = vld [vmem:[%s202 + $0x20] sm:$0xff]
  %v208 = vld [vmem:[%s202 + $0x28] sm:$0xff]
  %v209 = vld [vmem:[%s202 + $0x30] sm:$0xff]
  %v210 = vld [vmem:[%s202 + $0x38] sm:$0xff]
  %v211 = vlaneseq
  %v212 = vshrl.u32 %v211, 7
  %v213 = vsub.s32 2, %v212
  %v214 = vrot.slane %v24, %v213
  %v216 = vsel %vm122, %v201, 0
  %218 = vmatprep.subr.mxu0 0.0
  %219 = vmatpush1.msra.mxu0 %v203
  %220 = vmatprep.subr.mxu0 0.0
  %221 = vmatpush1.msra.mxu0 %v204
  %222 = vmatprep.subr.mxu0 0.0
  %223 = vmatpush1.msra.mxu0 %v205
  %224 = vmatprep.subr.mxu0 0.0
  %225 = vmatpush1.msra.mxu0 %v206
  %226 = vmatprep.subr.mxu0 0.0
  %227 = vmatpush1.msra.mxu0 %v207
  %228 = vmatprep.subr.mxu0 0.0
  %229 = vmatpush1.msra.mxu0 %v208
  %230 = vmatprep.subr.mxu0 0.0
  %231 = vmatpush1.msra.mxu0 %v209
  %232 = vmatprep.subr.mxu0 0.0
  %233 = vmatpush1.msra.mxu0 %v210
  %234 = vmatprep.subr.mxu0 0.0
  %235 = vmatpush1.msra.mxu0 0.0
  %236 = vmatprep.subr.mxu0 0.0
  %237 = vmatpush1.msra.mxu0 0.0
  %238 = vmatprep.subr.mxu0 0.0
  %239 = vmatpush1.msra.mxu0 0.0
  %240 = vmatprep.subr.mxu0 0.0
  %241 = vmatpush1.msra.mxu0 0.0
  %242 = vmatprep.subr.mxu0 0.0
  %243 = vmatpush1.msra.mxu0 0.0
  %244 = vmatprep.subr.mxu0 0.0
  %245 = vmatpush1.msra.mxu0 0.0
  %246 = vmatprep.subr.mxu0 0.0
  %247 = vmatpush1.msra.mxu0 0.0
  %248 = vmatprep.subr.mxu0 0.0
  %249 = vmatpush1.msra.mxu0 0.0
  %250 = vmatprep.subr.mxu0 0.0
  %251 = vmatpush1.msra.mxu0 0.0
  %252 = vmatprep.subr.mxu0 0.0
  %253 = vmatpush1.msra.mxu0 0.0
  %254 = vmatprep.subr.mxu0 0.0
  %255 = vmatpush1.msra.mxu0 0.0
  %256 = vmatprep.subr.mxu0 0.0
  %257 = vmatpush1.msra.mxu0 0.0
  %258 = vmatprep.subr.mxu0 0.0
  %259 = vmatpush1.msra.mxu0 0.0
  %260 = vmatprep.subr.mxu0 0.0
  %261 = vmatpush1.msra.mxu0 0.0
  %262 = vmatprep.subr.mxu0 0.0
  %263 = vmatpush1.msra.mxu0 0.0
  %264 = vmatprep.subr.mxu0 0.0
  %265 = vmatpush1.msra.mxu0 0.0
  %266 = vmatprep.subr.mxu0 0.0
  %267 = vmatpush1.msra.mxu0 0.0
  %268 = vmatprep.subr.mxu0 0.0
  %269 = vmatpush1.msra.mxu0 0.0
  %270 = vmatprep.subr.mxu0 0.0
  %271 = vmatpush1.msra.mxu0 0.0
  %272 = vmatprep.subr.mxu0 0.0
  %273 = vmatpush1.msra.mxu0 0.0
  %274 = vmatprep.subr.mxu0 0.0
  %275 = vmatpush1.msra.mxu0 0.0
  %276 = vmatprep.subr.mxu0 0.0
  %277 = vmatpush1.msra.mxu0 0.0
  %278 = vmatprep.subr.mxu0 0.0
  %279 = vmatpush1.msra.mxu0 0.0
  %280 = vmatprep.subr.mxu0 0.0
  %281 = vmatpush1.msra.mxu0 0.0
  %282 = vmatprep.mubr.f32.mxu0 0.0
  %283 = vmatmul.mubr.f32.gmra.mrb[0].mxu0 %v216
  %v284 = vpop.f32.mrb[0].mxu0
  %v285 = vadd.f32 %v214, %v284
  %v286 = vpop.f32.mrb[0].mxu0
  %287 = vdwg.mxu0
  %v288 = vxor.u32 %v285, 2147483648
  %v289 = vmul.f32 %v288, 1.442695
  %v290 = vpow.pop %v289
  %v291 = vadd.f32 %v290, 1.0
  %v292 = vrcp.pop %v291
  %v293 = vmul.f32 1.0, %v292
  %s294 = scalar_lea.vmem %s2, 128
  %v295 = vld [vmem:[%s294] sm:$0xff]
  %v296 = vld [vmem:[%s294 + $0x8] sm:$0xff]
  %v297 = vld [vmem:[%s294 + $0x10] sm:$0xff]
  %v298 = vld [vmem:[%s294 + $0x18] sm:$0xff]
  %v299 = vld [vmem:[%s294 + $0x20] sm:$0xff]
  %v300 = vld [vmem:[%s294 + $0x28] sm:$0xff]
  %v301 = vld [vmem:[%s294 + $0x30] sm:$0xff]
  %v302 = vld [vmem:[%s294 + $0x38] sm:$0xff]
  %v303 = vlaneseq
  %v304 = vshrl.u32 %v303, 7
  %v305 = vsub.s32 3, %v304
  %v306 = vrot.slane %v24, %v305
  %v308 = vsel %vm122, %v293, 0
  %310 = vmatprep.subr.mxu0 0.0
  %311 = vmatpush1.msra.mxu0 %v295
  %312 = vmatprep.subr.mxu0 0.0
  %313 = vmatpush1.msra.mxu0 %v296
  %314 = vmatprep.subr.mxu0 0.0
  %315 = vmatpush1.msra.mxu0 %v297
  %316 = vmatprep.subr.mxu0 0.0
  %317 = vmatpush1.msra.mxu0 %v298
  %318 = vmatprep.subr.mxu0 0.0
  %319 = vmatpush1.msra.mxu0 %v299
  %320 = vmatprep.subr.mxu0 0.0
  %321 = vmatpush1.msra.mxu0 %v300
  %322 = vmatprep.subr.mxu0 0.0
  %323 = vmatpush1.msra.mxu0 %v301
  %324 = vmatprep.subr.mxu0 0.0
  %325 = vmatpush1.msra.mxu0 %v302
  %326 = vmatprep.subr.mxu0 0.0
  %327 = vmatpush1.msra.mxu0 0.0
  %328 = vmatprep.subr.mxu0 0.0
  %329 = vmatpush1.msra.mxu0 0.0
  %330 = vmatprep.subr.mxu0 0.0
  %331 = vmatpush1.msra.mxu0 0.0
  %332 = vmatprep.subr.mxu0 0.0
  %333 = vmatpush1.msra.mxu0 0.0
  %334 = vmatprep.subr.mxu0 0.0
  %335 = vmatpush1.msra.mxu0 0.0
  %336 = vmatprep.subr.mxu0 0.0
  %337 = vmatpush1.msra.mxu0 0.0
  %338 = vmatprep.subr.mxu0 0.0
  %339 = vmatpush1.msra.mxu0 0.0
  %340 = vmatprep.subr.mxu0 0.0
  %341 = vmatpush1.msra.mxu0 0.0
  %342 = vmatprep.subr.mxu0 0.0
  %343 = vmatpush1.msra.mxu0 0.0
  %344 = vmatprep.subr.mxu0 0.0
  %345 = vmatpush1.msra.mxu0 0.0
  %346 = vmatprep.subr.mxu0 0.0
  %347 = vmatpush1.msra.mxu0 0.0
  %348 = vmatprep.subr.mxu0 0.0
  %349 = vmatpush1.msra.mxu0 0.0
  %350 = vmatprep.subr.mxu0 0.0
  %351 = vmatpush1.msra.mxu0 0.0
  %352 = vmatprep.subr.mxu0 0.0
  %353 = vmatpush1.msra.mxu0 0.0
  %354 = vmatprep.subr.mxu0 0.0
  %355 = vmatpush1.msra.mxu0 0.0
  %356 = vmatprep.subr.mxu0 0.0
  %357 = vmatpush1.msra.mxu0 0.0
  %358 = vmatprep.subr.mxu0 0.0
  %359 = vmatpush1.msra.mxu0 0.0
  %360 = vmatprep.subr.mxu0 0.0
  %361 = vmatpush1.msra.mxu0 0.0
  %362 = vmatprep.subr.mxu0 0.0
  %363 = vmatpush1.msra.mxu0 0.0
  %364 = vmatprep.subr.mxu0 0.0
  %365 = vmatpush1.msra.mxu0 0.0
  %366 = vmatprep.subr.mxu0 0.0
  %367 = vmatpush1.msra.mxu0 0.0
  %368 = vmatprep.subr.mxu0 0.0
  %369 = vmatpush1.msra.mxu0 0.0
  %370 = vmatprep.subr.mxu0 0.0
  %371 = vmatpush1.msra.mxu0 0.0
  %372 = vmatprep.subr.mxu0 0.0
  %373 = vmatpush1.msra.mxu0 0.0
  %374 = vmatprep.mubr.f32.mxu0 0.0
  %375 = vmatmul.mubr.f32.gmra.mrb[0].mxu0 %v308
  %v376 = vpop.f32.mrb[0].mxu0
  %v377 = vadd.f32 %v306, %v376
  %v378 = vpop.f32.mrb[0].mxu0
  %379 = vdwg.mxu0
  %v380 = vxor.u32 %v377, 2147483648
  %v381 = vmul.f32 %v380, 1.442695
  %v382 = vpow.pop %v381
  %v383 = vadd.f32 %v382, 1.0
  %v384 = vrcp.pop %v383
  %v385 = vmul.f32 1.0, %v384
  %v386 = vld [vmem:[%s3] sm:$0xff]
  %v387 = vld [vmem:[%s3 + $0x8] sm:$0xff]
  %v388 = vld [vmem:[%s3 + $0x10] sm:$0xff]
  %v389 = vld [vmem:[%s3 + $0x18] sm:$0xff]
  %v390 = vld [vmem:[%s3 + $0x20] sm:$0xff]
  %v391 = vld [vmem:[%s3 + $0x28] sm:$0xff]
  %v392 = vld [vmem:[%s3 + $0x30] sm:$0xff]
  %v393 = vld [vmem:[%s3 + $0x38] sm:$0xff]
  %v394 = vld [vmem:[%s5] sm:$0x1]
  %v396 = vlaneseq
  %v397 = vshrl.u32 %v396, 7
  %v398 = vsub.s32 0, %v397
  %v399 = vrot.slane %v394, %v398
  %v402 = vsel %vm122, %v385, 0
  %404 = vmatprep.subr.mxu0 0.0
  %405 = vmatpush1.msra.mxu0 %v386
  %406 = vmatprep.subr.mxu0 0.0
  %407 = vmatpush1.msra.mxu0 %v387
  %408 = vmatprep.subr.mxu0 0.0
  %409 = vmatpush1.msra.mxu0 %v388
  %410 = vmatprep.subr.mxu0 0.0
  %411 = vmatpush1.msra.mxu0 %v389
  %412 = vmatprep.subr.mxu0 0.0
  %413 = vmatpush1.msra.mxu0 %v390
  %414 = vmatprep.subr.mxu0 0.0
  %415 = vmatpush1.msra.mxu0 %v391
  %416 = vmatprep.subr.mxu0 0.0
  %417 = vmatpush1.msra.mxu0 %v392
  %418 = vmatprep.subr.mxu0 0.0
  %419 = vmatpush1.msra.mxu0 %v393
  %420 = vmatprep.subr.mxu0 0.0
  %421 = vmatpush1.msra.mxu0 0.0
  %422 = vmatprep.subr.mxu0 0.0
  %423 = vmatpush1.msra.mxu0 0.0
  %424 = vmatprep.subr.mxu0 0.0
  %425 = vmatpush1.msra.mxu0 0.0
  %426 = vmatprep.subr.mxu0 0.0
  %427 = vmatpush1.msra.mxu0 0.0
  %428 = vmatprep.subr.mxu0 0.0
  %429 = vmatpush1.msra.mxu0 0.0
  %430 = vmatprep.subr.mxu0 0.0
  %431 = vmatpush1.msra.mxu0 0.0
  %432 = vmatprep.subr.mxu0 0.0
  %433 = vmatpush1.msra.mxu0 0.0
  %434 = vmatprep.subr.mxu0 0.0
  %435 = vmatpush1.msra.mxu0 0.0
  %436 = vmatprep.subr.mxu0 0.0
  %437 = vmatpush1.msra.mxu0 0.0
  %438 = vmatprep.subr.mxu0 0.0
  %439 = vmatpush1.msra.mxu0 0.0
  %440 = vmatprep.subr.mxu0 0.0
  %441 = vmatpush1.msra.mxu0 0.0
  %442 = vmatprep.subr.mxu0 0.0
  %443 = vmatpush1.msra.mxu0 0.0
  %444 = vmatprep.subr.mxu0 0.0
  %445 = vmatpush1.msra.mxu0 0.0
  %446 = vmatprep.subr.mxu0 0.0
  %447 = vmatpush1.msra.mxu0 0.0
  %448 = vmatprep.subr.mxu0 0.0
  %449 = vmatpush1.msra.mxu0 0.0
  %450 = vmatprep.subr.mxu0 0.0
  %451 = vmatpush1.msra.mxu0 0.0
  %452 = vmatprep.subr.mxu0 0.0
  %453 = vmatpush1.msra.mxu0 0.0
  %454 = vmatprep.subr.mxu0 0.0
  %455 = vmatpush1.msra.mxu0 0.0
  %456 = vmatprep.subr.mxu0 0.0
  %457 = vmatpush1.msra.mxu0 0.0
  %458 = vmatprep.subr.mxu0 0.0
  %459 = vmatpush1.msra.mxu0 0.0
  %460 = vmatprep.subr.mxu0 0.0
  %461 = vmatpush1.msra.mxu0 0.0
  %462 = vmatprep.subr.mxu0 0.0
  %463 = vmatpush1.msra.mxu0 0.0
  %464 = vmatprep.subr.mxu0 0.0
  %465 = vmatpush1.msra.mxu0 0.0
  %466 = vmatprep.subr.mxu0 0.0
  %467 = vmatpush1.msra.mxu0 0.0
  %468 = vmatprep.mubr.f32.mxu0 0.0
  %469 = vmatmul.mubr.f32.gmra.mrb[0].mxu0 %v402
  %v470 = vpop.f32.mrb[0].mxu0
  %v471 = vadd.f32 %v399, %v470
  %v472 = vpop.f32.mrb[0].mxu0
  %473 = vdwg.mxu0
  %vm474 = vcmask 15360
  %475 = vst.msk [vmem:[%s6] sm:$0xff] %vm474, %v471
  // Predicated region
  $region26: #{pendulum_forward.1} parent=0 // pred_check
    _
  $region27: #{pendulum_forward.1} parent=0 // pred_check_branch
    %477 = sbr.rel (0) target = $region29
  $region28: #{pendulum_forward.1} parent=0 // pred_region
    _
  $region29: #{pendulum_forward.1} parent=0 // pred_fallthru
    _
  // Predicated region
  $region30: #{pendulum_forward.1} parent=0 // pred_check
    _
  $region31: #{pendulum_forward.1} parent=0 // pred_check_branch
    %479 = sbr.rel (0) target = $region33
  $region32: #{pendulum_forward.1} parent=0 // pred_region
    _
  $region33: #{pendulum_forward.1} parent=0 // pred_fallthru
    _

</llo_original>
